<compile_context>
chip_gen: v6e
topology: v6e:2x2x1
jax: 0.10.0
libtpu: 0.0.40
codegen_flags: <defaults>
</compile_context>

<pallas_src>
import functools

import jax
import jax.numpy as jnp
import numpy as np
from jax.experimental import pallas as pl
from jax.experimental.pallas import tpu as pltpu


# ---------------------------------------------------------------------------
# Pallas kernels (transposed-matmul form: out = W @ cols, pixel dim minor)
# ---------------------------------------------------------------------------
def _convT_bias_act_kernel(w_ref, cols_ref, b_ref, o_ref, *, mod_start):
    """out = epilogue(W @ cols + b) for one (batch, pixel) tile.

    W: (Nout, Kd) bf16 resident, cols: (1, Kd, tp) bf16 streamed, b: (Nout, 1) f32.
    Accumulation / bias / sigmoid in f32 (v5e has no bf16 VPU/EUP path).
    If mod_start is not None, only output ROWS >= mod_start get 2*sigmoid.
    """
    acc = jnp.dot(w_ref[...], cols_ref[0], preferred_element_type=jnp.float32)
    acc = acc + b_ref[...].astype(jnp.float32)            # (Nout, 1) lane-broadcast
    if mod_start is not None:
        row = jax.lax.broadcasted_iota(jnp.int32, acc.shape, 0)
        acc = jnp.where(row >= mod_start, 2.0 * jax.nn.sigmoid(acc), acc)
    o_ref[0] = acc.astype(o_ref.dtype)


def _convT_kernel(w_ref, cols_ref, o_ref):
    """out = W @ cols for one (batch, pixel) tile (mask folded upstream)."""
    o_ref[0] = jnp.dot(w_ref[...], cols_ref[0],
                       preferred_element_type=jnp.float32).astype(o_ref.dtype)


# ---------------------------------------------------------------------------
# Pallas wrappers
# ---------------------------------------------------------------------------
_VMEM_BUDGET = 40 << 20  # conservative: v7x has 64 MiB physical VMEM per TC


def _pick_tile_p(P, Kd, Nout, in_itemsize, w_itemsize, target=512):
    """Pixel tile: multiple of 128 (lane-dense), large, VMEM-safe."""
    tp = min(target, 128 * pl.cdiv(P, 128))
    tp = max(128, 128 * (tp // 128))

    def vmem_need(t):
        return (2 * Kd * t * in_itemsize        # cols block, double-buffered
                + Nout * Kd * w_itemsize        # resident weight tile
                + 8 * 128 * 4                   # bias tile (padded)
                + 2 * Nout * t * 4)             # f32 output, double-buffered

    while tp > 128 and vmem_need(tp) > _VMEM_BUDGET:
        tp -= 128
    return tp, vmem_need(tp)


def _pallas_convT(colsT, w, b=None, mod_start=None, tp_target=512):
    """out[n] = epilogue(w @ colsT[n] [+ b]) via a tiled Pallas MXU matmul.

    colsT: (N, Kd, P) bf16, w: (Nout, Kd) bf16, b: (Nout, 1) f32 or None.
    Returns (N, Nout, P) f32.
    """
    N, Kd, P = colsT.shape
    Nout = w.shape[0]
    tp, need = _pick_tile_p(P, Kd, Nout, colsT.dtype.itemsize, w.dtype.itemsize,
                            target=tp_target)
    Pp = pl.cdiv(P, tp) * tp
    if Pp != P:
        colsT = jnp.pad(colsT, ((0, 0), (0, 0), (0, Pp - P)))  # pad pixels: sliced off

    vmem_limit = min(64 << 20, max(32 << 20, int(1.5 * need) + (1 << 20)))
    cparams = pltpu.CompilerParams(dimension_semantics=("parallel", "parallel"),
                                   vmem_limit_bytes=vmem_limit)
    grid = (N, Pp // tp)

    if b is None:
        out = pl.pallas_call(
            _convT_kernel,
            out_shape=jax.ShapeDtypeStruct((N, Nout, Pp), jnp.float32),
            grid=grid,
            in_specs=[
                pl.BlockSpec((Nout, Kd), lambda n, p: (0, 0)),
                pl.BlockSpec((1, Kd, tp), lambda n, p: (n, 0, p)),
            ],
            out_specs=pl.BlockSpec((1, Nout, tp), lambda n, p: (n, 0, p)),
            compiler_params=cparams,
        )(w, colsT)
    else:
        out = pl.pallas_call(
            functools.partial(_convT_bias_act_kernel, mod_start=mod_start),
            out_shape=jax.ShapeDtypeStruct((N, Nout, Pp), jnp.float32),
            grid=grid,
            in_specs=[
                pl.BlockSpec((Nout, Kd), lambda n, p: (0, 0)),
                pl.BlockSpec((1, Kd, tp), lambda n, p: (n, 0, p)),
                pl.BlockSpec((Nout, 1), lambda n, p: (0, 0)),
            ],
            out_specs=pl.BlockSpec((1, Nout, tp), lambda n, p: (n, 0, p)),
            compiler_params=cparams,
        )(w, colsT, b)
    return out[:, :, :P]


# ---------------------------------------------------------------------------
# Forward pass (glue in plain JAX, compute in Pallas)
# ---------------------------------------------------------------------------
def deformable_conv2d_forward(x_nchw, params, kernel_size=3, stride=(1, 1), padding=1):
    N, Cin, H, W = x_nchw.shape
    K = kernel_size
    KK = K * K
    sh, sw = stride
    pad = padding
    Ho = (H + 2 * pad - K) // sh + 1
    Wo = (W + 2 * pad - K) // sw + 1
    P = Ho * Wo

    x = x_nchw.astype(jnp.float32)                         # NCHW, f32 for sampling

    # ---- regular im2col in transposed-cols layout (N, Cin*KK, P) ----------
    # Built directly in bf16 to halve HBM traffic into the memory-bound matmul.
    # TODO(synk): fold im2col into the Pallas kernel (K-tap reduction grid axis over
    # shifted windows of the padded input) to avoid materializing this 9x blow-up.
    xp = jnp.pad(x.astype(jnp.bfloat16), ((0, 0), (0, 0), (pad, pad), (pad, pad)))
    taps = []
    for ki in range(K):
        for kj in range(K):
            taps.append(xp[:, :, ki:ki + sh * Ho:sh, kj:kj + sw * Wo:sw])
    # kd index order = (cin, kk): matches w.reshape(Cout_x, -1) with no transpose.
    cols_reg = jnp.stack(taps, axis=2).reshape(N, Cin * KK, P)        # bf16

    # ---- fused offset + modulator conv (single Pallas matmul) -------------
    # Output rows [0, 2*KK) are offsets; rows [2*KK, 3*KK) get the 2*sigmoid epilogue.
    w_cat = jnp.concatenate([params["w_off"].reshape(2 * KK, -1),
                             params["w_mod"].reshape(KK, -1)], axis=0).astype(jnp.bfloat16)
    b_cat = jnp.concatenate([params["b_off"], params["b_mod"]])[:, None].astype(jnp.float32)
    offmod = _pallas_convT(cols_reg, w_cat, b=b_cat, mod_start=2 * KK)  # (N, 3KK, P) f32

    # torchvision channel order: interleaved (dy, dx) per tap.
    off = offmod[:, :2 * KK, :].reshape(N, KK, 2, Ho, Wo)
    off_y, off_x = off[:, :, 0], off[:, :, 1]              # (N, KK, Ho, Wo)
    mod = offmod[:, 2 * KK:, :]                            # (N, KK, P), 2*sigmoid(.) done

    # ---- sampling coordinates ---------------------------------------------
    ky = jnp.repeat(jnp.arange(K), K).astype(jnp.float32)  # (KK,) row-major taps
    kx = jnp.tile(jnp.arange(K), K).astype(jnp.float32)
    base_y = (jnp.arange(Ho) * sh - pad).astype(jnp.float32)
    base_x = (jnp.arange(Wo) * sw - pad).astype(jnp.float32)
    py = base_y[None, None, :, None] + ky[None, :, None, None] + off_y   # (N,KK,Ho,Wo)
    px = base_x[None, None, None, :] + kx[None, :, None, None] + off_x

    # ---- bilinear sampling with zero padding (torchvision semantics) ------
    # TODO(synk): data-dependent bilinear gather stays in plain JAX; fusing it into
    # the deform matmul kernel (VMEM-resident x or prefetched index DMA) is the next step.
    y0 = jnp.floor(py)
    x0 = jnp.floor(px)
    ly = py - y0
    lx = px - x0
    y0i = y0.astype(jnp.int32)
    x0i = x0.astype(jnp.int32)
    y1i = y0i + 1
    x1i = x0i + 1

    x_flat = x.reshape(N, Cin, H * W)

    def gather(yi, xi):
        valid = ((yi >= 0) & (yi < H) & (xi >= 0) & (xi < W)).astype(jnp.float32)
        idx = jnp.clip(yi, 0, H - 1) * W + jnp.clip(xi, 0, W - 1)        # (N,KK,Ho,Wo)
        g = jnp.take_along_axis(x_flat, idx.reshape(N, 1, -1), axis=2)   # (N,Cin,KK*P)
        return g.reshape(N, Cin, KK, P), valid.reshape(N, 1, KK, P)

    g00, v00 = gather(y0i, x0i)
    g01, v01 = gather(y0i, x1i)
    g10, v10 = gather(y1i, x0i)
    g11, v11 = gather(y1i, x1i)
    w00 = ((1.0 - ly) * (1.0 - lx)).reshape(N, 1, KK, P)
    w01 = ((1.0 - ly) * lx).reshape(N, 1, KK, P)
    w10 = (ly * (1.0 - lx)).reshape(N, 1, KK, P)
    w11 = (ly * lx).reshape(N, 1, KK, P)
    sampled = g00 * v00 * w00 + g01 * v01 * w01 + g10 * v10 * w10 + g11 * v11 * w11
    # Fold the modulation mask here (no repeated-mask array, no extra streamed
    # operand in the Pallas deform matmul).
    sampled = sampled * mod[:, None, :, :]                  # (N, Cin, KK, P)

    cols_def = sampled.reshape(N, Cin * KK, P).astype(jnp.bfloat16)

    # ---- modulated deformed-im2col matmul (Pallas) -------------------------
    Cout = params["w_reg"].shape[0]
    w_reg = params["w_reg"].reshape(Cout, -1).astype(jnp.bfloat16)       # (Cout, Cin*KK)
    b_reg = params.get("b_reg", None)
    if b_reg is not None:
        out = _pallas_convT(cols_def, w_reg,
                            b=b_reg[:, None].astype(jnp.float32), mod_start=None)
    else:
        out = _pallas_convT(cols_def, w_reg)
    return out.reshape(N, Cout, Ho, Wo)                     # already NCHW


# ---------------------------------------------------------------------------
# Main
# ---------------------------------------------------------------------------
if __name__ == "__main__":
    N, Cin, H, W = 2, 4, 16, 16
    Cout, K = 8, 3
    key = jax.random.PRNGKey(0)
    kx_key, kw_key = jax.random.split(key)

    x = jax.random.normal(kx_key, (N, Cin, H, W), jnp.float32)

    # Parameters per the module's __init__:
    #   offset_conv / modulator_conv weights & biases initialized to 0.0,
    #   regular_conv weight deterministic (synthetic), bias=False.
    params = {
        "w_off": jnp.zeros((2 * K * K, Cin, K, K), jnp.float32),
        "b_off": jnp.zeros((2 * K * K,), jnp.float32),
        "w_mod": jnp.zeros((K * K, Cin, K, K), jnp.float32),
        "b_mod": jnp.zeros((K * K,), jnp.float32),
        "w_reg": 0.1 * jax.random.normal(kw_key, (Cout, Cin, K, K), jnp.float32),
    }

    fwd = jax.jit(deformable_conv2d_forward)
    out = fwd(x, params)
    out = jax.block_until_ready(out)
    assert out.shape == (N, Cout, H, W) and out.dtype == jnp.float32

    # Sanity check: with zero offsets and unit modulation (as __init__ dictates),
    # deformable conv reduces to a plain 3x3 conv. bf16 matmul operands with f32
    # accumulation stay well inside the 1e-2 tolerance.
    ref = jax.lax.conv_general_dilated(
        x, params["w_reg"], window_strides=(1, 1), padding=((1, 1), (1, 1)),
        dimension_numbers=("NCHW", "OIHW", "NCHW"))
    ref = jax.block_until_ready(ref)
    assert np.allclose(np.asarray(out), np.asarray(ref), atol=1e-2, rtol=1e-2)

    print("KERNEL_OK")
</pallas_src>

<mosaic_0001>
module attributes {stable_mosaic.version = 11 : i64} {
  func.func @_convT_bias_act_kernel(%arg0: i32, %arg1: i32, %arg2: memref<27x36xbf16, #tpu.memory_space<vmem>>, %arg3: memref<1x36x256xbf16, #tpu.memory_space<vmem>>, %arg4: memref<27x1xf32, #tpu.memory_space<vmem>>, %arg5: memref<1x27x256xf32, #tpu.memory_space<vmem>>) attributes {dimension_semantics = [#tpu.dimension_semantics<parallel>, #tpu.dimension_semantics<parallel>], iteration_bounds = array<i64: 2, 1>, scalar_prefetch = 0 : i64, scratch_operands = 0 : i64, tpu.core_type = #tpu.core_type<tc>, window_params = [{pipeline_mode = #tpu.pipeline_mode<synchronous>, transform_indices = @transform_0, window_bounds = array<i64: 27, 36>}, {transform_indices = @transform_1, window_bounds = array<i64: 1, 36, 256>}, {pipeline_mode = #tpu.pipeline_mode<synchronous>, transform_indices = @transform_2, window_bounds = array<i64: 27, 1>}, {transform_indices = @transform_3, window_bounds = array<i64: 1, 27, 256>}]} {
    %c0 = arith.constant 0 : index
    %c0_0 = arith.constant 0 : index
    %0 = vector.load %arg2[%c0, %c0_0] : memref<27x36xbf16, #tpu.memory_space<vmem>>, vector<27x36xbf16>
    %c0_1 = arith.constant 0 : index
    %c0_2 = arith.constant 0 : index
    %c0_3 = arith.constant 0 : index
    %1 = vector.load %arg3[%c0_1, %c0_2, %c0_3] : memref<1x36x256xbf16, #tpu.memory_space<vmem>>, vector<1x36x256xbf16>
    %2 = vector.shape_cast %1 : vector<1x36x256xbf16> to vector<36x256xbf16>
    %cst = arith.constant dense<0.000000e+00> : vector<27x256xf32>
    %3 = tpu.matmul %0, %2, %cst {dimension_numbers = #tpu.dot_dimension_numbers<[1], [0], [0], [1], [0, 0, 1, 1], [], []>} : vector<27x36xbf16>, vector<36x256xbf16>, vector<27x256xf32> -> vector<27x256xf32>
    %c0_4 = arith.constant 0 : index
    %c0_5 = arith.constant 0 : index
    %4 = vector.load %arg4[%c0_4, %c0_5] : memref<27x1xf32, #tpu.memory_space<vmem>>, vector<27x1xf32>
    %5 = vector.broadcast %4 : vector<27x1xf32> to vector<27x256xf32>
    %6 = arith.addf %3, %5 : vector<27x256xf32>
    %7 = tpu.iota {dimensions = array<i32: 0>} : vector<27x256xi32>
    %c18_i32 = arith.constant 18 : i32
    %8 = vector.broadcast %c18_i32 : i32 to vector<27x256xi32>
    %9 = arith.cmpi sge, %7, %8 : vector<27x256xi32>
    %10 = arith.negf %6 : vector<27x256xf32>
    %11 = math.exp %10 : vector<27x256xf32>
    %cst_6 = arith.constant 1.000000e+00 : f32
    %12 = vector.broadcast %cst_6 : f32 to vector<27x256xf32>
    %13 = arith.addf %12, %11 : vector<27x256xf32>
    %14 = arith.divf %12, %13 : vector<27x256xf32>
    %cst_7 = arith.constant 2.000000e+00 : f32
    %15 = vector.broadcast %cst_7 : f32 to vector<27x256xf32>
    %16 = arith.mulf %15, %14 : vector<27x256xf32>
    %17 = arith.select %9, %16, %6 : vector<27x256xi1>, vector<27x256xf32>
    %c0_8 = arith.constant 0 : index
    %c0_9 = arith.constant 0 : index
    %c0_10 = arith.constant 0 : index
    %18 = vector.load %arg5[%c0_8, %c0_9, %c0_10] : memref<1x27x256xf32, #tpu.memory_space<vmem>>, vector<1x27x256xf32>
    %19 = vector.shape_cast %18 : vector<1x27x256xf32> to vector<27x256xf32>
    %20 = vector.shape_cast %17 : vector<27x256xf32> to vector<1x27x256xf32>
    tpu.vector_store %arg5[%c0_8, %c0_9, %c0_10], %20 {strides = array<i32>} : memref<1x27x256xf32, #tpu.memory_space<vmem>>, vector<1x27x256xf32>,
    return
  }
  func.func @transform_0(%arg0: i32, %arg1: i32) -> (i32, i32) {
    %c0_i32 = arith.constant 0 : i32
    %c0_i32_0 = arith.constant 0 : i32
    %c0_i32_1 = arith.constant 0 : i32
    return %c0_i32, %c0_i32_0 : i32, i32
  }
  func.func @transform_1(%arg0: i32, %arg1: i32) -> (i32, i32, i32) {
    %c0_i32 = arith.constant 0 : i32
    %c0_i32_0 = arith.constant 0 : i32
    return %arg0, %c0_i32, %arg1 : i32, i32, i32
  }
  func.func @transform_2(%arg0: i32, %arg1: i32) -> (i32, i32) {
    %c0_i32 = arith.constant 0 : i32
    %c0_i32_0 = arith.constant 0 : i32
    %c0_i32_1 = arith.constant 0 : i32
    return %c0_i32, %c0_i32_0 : i32, i32
  }
  func.func @transform_3(%arg0: i32, %arg1: i32) -> (i32, i32, i32) {
    %c0_i32 = arith.constant 0 : i32
    %c0_i32_0 = arith.constant 0 : i32
    return %arg0, %c0_i32, %arg1 : i32, i32, i32
  }
}

module attributes {stable_mosaic.version = 11 : i64} {
  func.func @_convT_kernel(%arg0: i32, %arg1: i32, %arg2: memref<8x36xbf16, #tpu.memory_space<vmem>>, %arg3: memref<1x36x256xbf16, #tpu.memory_space<vmem>>, %arg4: memref<1x8x256xf32, #tpu.memory_space<vmem>>) attributes {dimension_semantics = [#tpu.dimension_semantics<parallel>, #tpu.dimension_semantics<parallel>], iteration_bounds = array<i64: 2, 1>, scalar_prefetch = 0 : i64, scratch_operands = 0 : i64, tpu.core_type = #tpu.core_type<tc>, window_params = [{pipeline_mode = #tpu.pipeline_mode<synchronous>, transform_indices = @transform_0, window_bounds = array<i64: 8, 36>}, {transform_indices = @transform_1, window_bounds = array<i64: 1, 36, 256>}, {transform_indices = @transform_2, window_bounds = array<i64: 1, 8, 256>}]} {
    %c0 = arith.constant 0 : index
    %c0_0 = arith.constant 0 : index
    %0 = vector.load %arg2[%c0, %c0_0] : memref<8x36xbf16, #tpu.memory_space<vmem>>, vector<8x36xbf16>
    %c0_1 = arith.constant 0 : index
    %c0_2 = arith.constant 0 : index
    %c0_3 = arith.constant 0 : index
    %1 = vector.load %arg3[%c0_1, %c0_2, %c0_3] : memref<1x36x256xbf16, #tpu.memory_space<vmem>>, vector<1x36x256xbf16>
    %2 = vector.shape_cast %1 : vector<1x36x256xbf16> to vector<36x256xbf16>
    %cst = arith.constant dense<0.000000e+00> : vector<8x256xf32>
    %3 = tpu.matmul %0, %2, %cst {dimension_numbers = #tpu.dot_dimension_numbers<[1], [0], [0], [1], [0, 0, 1, 1], [], []>} : vector<8x36xbf16>, vector<36x256xbf16>, vector<8x256xf32> -> vector<8x256xf32>
    %c0_4 = arith.constant 0 : index
    %c0_5 = arith.constant 0 : index
    %c0_6 = arith.constant 0 : index
    %4 = vector.load %arg4[%c0_4, %c0_5, %c0_6] : memref<1x8x256xf32, #tpu.memory_space<vmem>>, vector<1x8x256xf32>
    %5 = vector.shape_cast %4 : vector<1x8x256xf32> to vector<8x256xf32>
    %6 = vector.shape_cast %3 : vector<8x256xf32> to vector<1x8x256xf32>
    tpu.vector_store %arg4[%c0_4, %c0_5, %c0_6], %6 {strides = array<i32>} : memref<1x8x256xf32, #tpu.memory_space<vmem>>, vector<1x8x256xf32>,
    return
  }
  func.func @transform_0(%arg0: i32, %arg1: i32) -> (i32, i32) {
    %c0_i32 = arith.constant 0 : i32
    %c0_i32_0 = arith.constant 0 : i32
    %c0_i32_1 = arith.constant 0 : i32
    return %c0_i32, %c0_i32_0 : i32, i32
  }
  func.func @transform_1(%arg0: i32, %arg1: i32) -> (i32, i32, i32) {
    %c0_i32 = arith.constant 0 : i32
    %c0_i32_0 = arith.constant 0 : i32
    return %arg0, %c0_i32, %arg1 : i32, i32, i32
  }
  func.func @transform_2(%arg0: i32, %arg1: i32) -> (i32, i32, i32) {
    %c0_i32 = arith.constant 0 : i32
    %c0_i32_0 = arith.constant 0 : i32
    return %arg0, %c0_i32, %arg1 : i32, i32, i32
  }
}

</mosaic_0001>

<llo_original>
// kernel: deformable_conv2d_forward.2
$region0: #{deformable_conv2d_forward.2}
  #allocation0 [shape = 'u32[]', space=smem, size = 0x4, offset = 0x4, fixed_abs, tag = 'smem constant byte address 0x4 - core index']
  #allocation1 [shape = 'u32[144,128]{1,0:T(1,128)}', space=vmem, size = 0x12000, scoped, tag = 'internal scratch']
  %s0 = inlined_call_operand.vmem [shape: bf16[27,36], index: 0, kind: input, shape index: {}]
  %s1 = inlined_call_operand.vmem [shape: bf16[2,36,256], index: 1, kind: input, shape index: {}]
  %s2 = inlined_call_operand.vmem [shape: f32[27,1], index: 2, kind: input, shape index: {}]
  %s3 = inlined_call_operand.vmem [shape: f32[2,27,256], index: 3, kind: output, shape index: {}]
  %s4 = sld [smem:[#allocation0]]
  $region45: #{deformable_conv2d_forward.2} parent=0
    _
  %s6 = ssub.s32 1, %s4
  %s7 = scalar_select 0, %s6, %s4
  loop: start=0, step=1, limit=4
  $region2: #{deformable_conv2d_forward.2} parent=0 // loop_pre_header
    _
  $region3: #{deformable_conv2d_forward.2} parent=0 // loop_header
    %s9 = sphi 0, %s13
    %p10 = scmp.ge.s32.totalorder %s9, 4
    %s16 = sphi 0, %s28
    %s17 = sphi 0, %s24
    %s18 = sphi 0, %s16
    %s19 = sphi 0, %s17
    %s20 = sphi 0, %s18
    %s21 = sphi 0, %s19
    %s29 = sphi 0, %s29
    %s31 = sphi 0, %s29
    %s32 = sphi 0, %s31
    %s46 = sphi 0, %s32
    %s54 = sphi 0, %s56
    %s57 = sphi 0, %s54
    %s58 = sphi 0, %s57
    %s74 = sphi 0, %s58
    %s78 = sphi 0, %s78
    %s80 = sphi 0, %s78
    %s81 = sphi 0, %s80
    %s95 = sphi 0, %s81
    %s103 = sphi 0, %s105
    %s106 = sphi 0, %s103
    %s107 = sphi 0, %s106
    %s123 = sphi 0, %s107
  $region4: #{deformable_conv2d_forward.2} parent=0 // loop_header_branch
    %12 = sbr.rel (%p10) target = $region8
  $region5: #{deformable_conv2d_forward.2} parent=0 // loop_body
    %s14 = ssub.s32 %s9, 1
    %s15 = ssub.s32 %s9, 2
    %s22 = sadd.s32 1, %s17
    %p23 = scmp.ge.s32.totalorder %s22, 1
    %s24 = scalar_select %p23, 0, %s22
    %s25 = sadd.s32 1, %s16
    %s26 = scalar_select %p23, %s25, %s16
    %p27 = scmp.ge.s32.totalorder %s26, 2
    %s28 = scalar_select %p27, 0, %s26
    %s30 = sadd.s32 %s29, 1
    %p33 = scmp.eq.s32.totalorder %s9, 1
    %p34 = scmp.ne.s32.totalorder %s29, %s31
    %p35 = scmp.eq.s32.totalorder %s9, 0
    %p36 = por %p34, %p35
    %p37 = scmp.ne.s32.totalorder %s29, %s31
    %p38 = scmp.eq.s32.totalorder %s14, 1
    %p39 = por %p37, %p38
    %p40 = scmp.ne.s32.totalorder %s31, %s32
    %p41 = scmp.eq.s32.totalorder %s14, 0
    %p42 = por %p40, %p41
    %p43 = scmp.ne.s32.totalorder %s31, %s32
    %p44 = scmp.eq.s32.totalorder %s15, 1
    %p45 = por %p43, %p44
    %p47 = scmp.ne.s32.totalorder %s32, %s46
    %p48 = scmp.eq.s32.totalorder %s15, 0
    %p49 = por %p47, %p48
    %s50 = ssub.s32 %s16, %s28
    %s51 = ssub.s32 %s17, %s24
    %s52 = sor.u32 %s50, %s51
    %p53 = scmp.eq.s32.totalorder %s52, 0
    %s55 = sadd.s32 %s54, 1
    %s56 = scalar_select %p53, %s54, %s55
    %p59 = pneg %p53
    %p60 = scmp.eq.s32.totalorder %s9, 1
    %p61 = por %p59, %p60
    %p62 = scmp.ne.s32.totalorder %s54, %s57
    %p63 = scmp.eq.s32.totalorder %s9, 0
    %p64 = por %p62, %p63
    %p65 = scmp.ne.s32.totalorder %s54, %s57
    %p66 = scmp.eq.s32.totalorder %s14, 1
    %p67 = por %p65, %p66
    %p68 = scmp.ne.s32.totalorder %s57, %s58
    %p69 = scmp.eq.s32.totalorder %s14, 0
    %p70 = por %p68, %p69
    %p71 = scmp.ne.s32.totalorder %s57, %s58
    %p72 = scmp.eq.s32.totalorder %s15, 1
    %p73 = por %p71, %p72
    %p75 = scmp.ne.s32.totalorder %s58, %s74
    %p76 = scmp.eq.s32.totalorder %s15, 0
    %p77 = por %p75, %p76
    %s79 = sadd.s32 %s78, 1
    %p82 = scmp.eq.s32.totalorder %s9, 1
    %p83 = scmp.ne.s32.totalorder %s78, %s80
    %p84 = scmp.eq.s32.totalorder %s9, 0
    %p85 = por %p83, %p84
    %p86 = scmp.ne.s32.totalorder %s78, %s80
    %p87 = scmp.eq.s32.totalorder %s14, 1
    %p88 = por %p86, %p87
    %p89 = scmp.ne.s32.totalorder %s80, %s81
    %p90 = scmp.eq.s32.totalorder %s14, 0
    %p91 = por %p89, %p90
    %p92 = scmp.ne.s32.totalorder %s80, %s81
    %p93 = scmp.eq.s32.totalorder %s15, 1
    %p94 = por %p92, %p93
    %p96 = scmp.ne.s32.totalorder %s81, %s95
    %p97 = scmp.eq.s32.totalorder %s15, 0
    %p98 = por %p96, %p97
    %s99 = ssub.s32 %s16, %s28
    %s100 = ssub.s32 %s17, %s24
    %s101 = sor.u32 %s99, %s100
    %p102 = scmp.eq.s32.totalorder %s101, 0
    %s104 = sadd.s32 %s103, 1
    %s105 = scalar_select %p102, %s103, %s104
    %p108 = pneg %p102
    %p109 = scmp.eq.s32.totalorder %s9, 1
    %p110 = por %p108, %p109
    %p111 = scmp.ne.s32.totalorder %s103, %s106
    %p112 = scmp.eq.s32.totalorder %s9, 0
    %p113 = por %p111, %p112
    %p114 = scmp.ne.s32.totalorder %s103, %s106
    %p115 = scmp.eq.s32.totalorder %s14, 1
    %p116 = por %p114, %p115
    %p117 = scmp.ne.s32.totalorder %s106, %s107
    %p118 = scmp.eq.s32.totalorder %s14, 0
    %p119 = por %p117, %p118
    %p120 = scmp.ne.s32.totalorder %s106, %s107
    %p121 = scmp.eq.s32.totalorder %s15, 1
    %p122 = por %p120, %p121
    %p124 = scmp.ne.s32.totalorder %s107, %s123
    %p125 = scmp.eq.s32.totalorder %s15, 0
    %p126 = por %p124, %p125
    %p127 = scmp.le.s32.totalorder 1, %s9
    %p128 = scmp.lt.s32.totalorder %s9, 3
    %p129 = pnand %p127, %p128
    %p130 = pneg %p129
    // Predicated region
    $region9: #{deformable_conv2d_forward.2} parent=5 // pred_check
      _
    $region10: #{deformable_conv2d_forward.2} parent=5 // pred_check_branch
      %132 = sbr.rel (%p129) target = $region12
    $region11: #{deformable_conv2d_forward.2} parent=5 // pred_region
      %s133 = ssub.s32 %s9, 1
      // Predicated region
      $region13: #{deformable_conv2d_forward.2} parent=11 // pred_check
        %p134 = pneg %p42
      $region14: #{deformable_conv2d_forward.2} parent=11 // pred_check_branch
        %136 = sbr.rel (%p134) target = $region16
      $region15: #{deformable_conv2d_forward.2} parent=11 // pred_region
        _
      $region16: #{deformable_conv2d_forward.2} parent=11 // pred_fallthru
        _
      // Predicated region
      $region17: #{deformable_conv2d_forward.2} parent=11 // pred_check
        %p137 = pneg %p91
      $region18: #{deformable_conv2d_forward.2} parent=11 // pred_check_branch
        %139 = sbr.rel (%p137) target = $region20
      $region19: #{deformable_conv2d_forward.2} parent=11 // pred_region
        _
      $region20: #{deformable_conv2d_forward.2} parent=11 // pred_fallthru
        _
    $region12: #{deformable_conv2d_forward.2} parent=5 // pred_fallthru
      _
    %p140 = scmp.lt.s32.totalorder %s9, 2
    // Predicated region
    $region21: #{deformable_conv2d_forward.2} parent=5 // pred_check
      %p141 = pneg %p140
    $region22: #{deformable_conv2d_forward.2} parent=5 // pred_check_branch
      %143 = sbr.rel (%p141) target = $region24
    $region23: #{deformable_conv2d_forward.2} parent=5 // pred_region
      // Predicated region
      $region25: #{deformable_conv2d_forward.2} parent=23 // pred_check
        %p144 = pneg %p64
      $region26: #{deformable_conv2d_forward.2} parent=23 // pred_check_branch
        %146 = sbr.rel (%p144) target = $region28
      $region27: #{deformable_conv2d_forward.2} parent=23 // pred_region
        %s147 = smul.u32 2, %s17
        %p148 = scmp.lt.s32.totalorder %s16, 1
        %s149 = scalar_select %p148, %s16, 1
        %p150 = scmp.lt.s32.totalorder %s147, 1
        %s151 = scalar_select %p150, %s147, 1
        %s152 = smul.addr %s149, 10
        %s153 = sadd.s32 %s151, %s152
        %s154 = smul.addr %s153, 4
        %s155 = scalar_lea.vmem %s1, %s154
        %s156 = smul.u32 2, %s17
      $region28: #{deformable_conv2d_forward.2} parent=23 // pred_fallthru
        _
    $region24: #{deformable_conv2d_forward.2} parent=5 // pred_fallthru
      _
    %p157 = scmp.le.s32.totalorder 1, %s9
    %p158 = scmp.lt.s32.totalorder %s9, 3
    %p159 = pnand %p157, %p158
    %p160 = pneg %p159
    // Predicated region
    $region29: #{deformable_conv2d_forward.2} parent=5 // pred_check
      _
    $region30: #{deformable_conv2d_forward.2} parent=5 // pred_check_branch
      %162 = sbr.rel (%p159) target = $region32
    $region31: #{deformable_conv2d_forward.2} parent=5 // pred_region
      %s163 = ssub.s32 %s9, 1
      %p164 = pneg %p42
      %p165 = pneg %p39
      %s166 = smul.u32 2, %s19
      %p167 = scmp.lt.s32.totalorder %s18, 1
      %s168 = scalar_select %p167, %s18, 1
      %p169 = scmp.lt.s32.totalorder %s166, 1
      %s170 = scalar_select %p169, %s166, 1
      %s171 = smul.addr %s168, 10
      %s172 = sadd.s32 %s170, %s171
      %s173 = smul.addr %s172, 4
      %s174 = scalar_lea.vmem %s1, %s173
      %p175 = pneg %p70
      %p176 = pneg %p67
      %p177 = pneg %p91
      %p178 = pneg %p88
      %p179 = pneg %p119
      %p180 = pneg %p116
      %s181 = smul.u32 2, %s19
      %p182 = scmp.lt.s32.totalorder %s18, 1
      %s183 = scalar_select %p182, %s18, 1
      %p184 = scmp.lt.s32.totalorder %s181, 1
      %s185 = scalar_select %p184, %s181, 1
      %s186 = smul.addr %s183, 8
      %s187 = sadd.s32 %s185, %s186
      %s188 = smul.addr %s187, 8
      %s189 = scalar_lea.vmem %s3, %s188
      %s190 = smul.u32 2, %s19
      %p191 = scmp.lt.s32.totalorder %s18, 1
      %s192 = scalar_select %p191, %s18, 1
      %p193 = scmp.lt.s32.totalorder %s190, 1
      %s194 = scalar_select %p193, %s190, 1
      %s195 = smul.addr %s192, 10
      %s196 = sadd.s32 %s194, %s195
      %s197 = smul.addr %s196, 4
      %s198 = scalar_lea.vmem %s1, %s197
      %s199 = smul.u32 2, %s19
      %s200 = smul.u32 2, %s19
      %p201 = scmp.lt.s32.totalorder %s18, 1
      %s202 = scalar_select %p201, %s18, 1
      %p203 = scmp.lt.s32.totalorder %s200, 1
      %s204 = scalar_select %p203, %s200, 1
      %s205 = smul.addr %s202, 8
      %s206 = sadd.s32 %s204, %s205
      %s207 = smul.addr %s206, 8
      %s208 = scalar_lea.vmem %s3, %s207
      %s209 = smul.u32 2, %s19
      %v211 = vld [vmem:[%s0] sm:$0xf]
      %v212 = vld [vmem:[%s0 + $0x4] sm:$0xf]
      %v213 = vld [vmem:[%s0 + $0x8] sm:$0xf]
      %v214 = vld [vmem:[%s0 + $0xc] sm:$0x3]
      %v215 = vld [vmem:[%s198] sm:$0xff]
      %v216 = vld [vmem:[%s198 + $0x8] sm:$0xff]
      %v217 = vld [vmem:[%s198 + $0x10] sm:$0xff]
      %v218 = vld [vmem:[%s198 + $0x18] sm:$0xff]
      %v219 = vld [vmem:[%s198 + $0x20] sm:$0x33]
      %v220 = vld [vmem:[%s2] sm:$0xff]
      %v221 = vld [vmem:[%s2 + $0x8] sm:$0xff]
      %v222 = vld [vmem:[%s2 + $0x10] sm:$0xff]
      %v223 = vld [vmem:[%s2 + $0x18] sm:$0x7]
      %225 = vset.pattern.permute.xlu0 0
      %226 = vperm.xlu0 %225, %v220
      %v227 = vpop.permute.xlu0 %226
      %230 = vset.pattern.permute.xlu0 0
      %231 = vperm.xlu0 %230, %v221
      %v232 = vpop.permute.xlu0 %231
      %235 = vset.pattern.permute.xlu0 0
      %236 = vperm.xlu0 %235, %v222
      %v237 = vpop.permute.xlu0 %236
      %240 = vset.pattern.permute.xlu0 0
      %241 = vperm.xlu0 %240, %v223
      %v242 = vpop.permute.xlu0 %241
      %v248 = vunpack.c.l.b16 %v211
      %v249 = vunpack.c.l.b16 %v212
      %v250 = vunpack.c.l.b16 %v213
      %v251 = vunpack.c.l.b16 %v214
      %v252 = vpack.c.b16 %v249, %v248
      %v253 = vpack.c.b16 %v251, %v250
      %v259 = vunpack.c.l.b16 %v215
      %v260 = vunpack.c.h.b16 %v215
      %v261 = vunpack.c.l.b16 %v216
      %v262 = vunpack.c.h.b16 %v216
      %v263 = vunpack.c.l.b16 %v217
      %v264 = vunpack.c.h.b16 %v217
      %v265 = vunpack.c.l.b16 %v218
      %v266 = vunpack.c.h.b16 %v218
      %v267 = vunpack.c.l.b16 %v219
      %v268 = vunpack.c.h.b16 %v219
      %v269 = vpack.c.b16 %v261, %v259
      %v270 = vpack.c.b16 %v262, %v260
      %v271 = vpack.c.b16 %v265, %v263
      %v272 = vpack.c.b16 %v266, %v264
      %v273 = vpack.c.b16 %v267, %v267
      %v274 = vpack.c.b16 %v268, %v268
      %vm279 = vcmask 293888
      %v281 = vsel %vm279, %v252, 0
      %v284 = vsel %vm279, %v253, 0
      %vm286 = vcmask 1041408
      %v288 = vsel %vm286, %v273, 0
      %v291 = vsel %vm286, %v274, 0
      %293 = vmatprep.subr.bf16.mxu0 0
      %294 = vmatpush1.bf16.msra.mxu0 0
      %295 = vmatprep.subr.bf16.mxu0 0
      %296 = vmatpush1.bf16.msra.mxu0 0
      %297 = vmatprep.subr.bf16.mxu0 0
      %298 = vmatpush1.bf16.msra.mxu0 0
      %299 = vmatprep.subr.bf16.mxu0 0
      %300 = vmatpush1.bf16.msra.mxu0 0
      %301 = vmatprep.subr.bf16.mxu0 0
      %302 = vmatpush1.bf16.msra.mxu0 0
      %303 = vmatprep.subr.bf16.mxu0 %v291
      %304 = vmatpush1.bf16.msra.mxu0 %v288
      %305 = vmatprep.subr.bf16.mxu0 %v272
      %306 = vmatpush1.bf16.msra.mxu0 %v271
      %307 = vmatprep.subr.bf16.mxu0 %v270
      %308 = vmatpush1.bf16.msra.mxu0 %v269
      %309 = vmatprep.subr.bf16.mxu0 0
      %310 = vmatpush2.bf16.msra.mxu0 0
      %311 = vmatprep.subr.bf16.mxu0 0
      %312 = vmatpush2.bf16.msra.mxu0 0
      %313 = vmatprep.subr.bf16.mxu0 0
      %314 = vmatpush2.bf16.msra.mxu0 0
      %315 = vmatprep.subr.bf16.mxu0 0
      %316 = vmatpush2.bf16.msra.mxu0 0
      %317 = vmatprep.subr.bf16.mxu0 0
      %318 = vmatpush2.bf16.msra.mxu0 0
      %319 = vmatprep.subr.bf16.mxu0 0
      %320 = vmatpush2.bf16.msra.mxu0 0
      %321 = vmatprep.subr.bf16.mxu0 0
      %322 = vmatpush2.bf16.msra.mxu0 0
      %323 = vmatprep.subr.bf16.mxu0 0
      %324 = vmatpush2.bf16.msra.mxu0 0
      %325 = vmatprep.mubr.bf16.mxu0 0
      %326 = vmatmul.mubr.bf16.gmra.mxu0 %v281
      %v327 = vpop.f32.mrf.mxu0
      %v328 = vadd.f32 %v227, %v327
      %v329 = vpop.f32.mrf.mxu0
      %v330 = vadd.f32 %v227, %v329
      %v331 = vpop.f32.mrf.mxu0
      %v332 = vadd.f32 %v232, %v331
      %v333 = vpop.f32.mrf.mxu0
      %v334 = vadd.f32 %v232, %v333
      %335 = vmatprep.mubr.bf16.mxu0 0
      %336 = vmatmul.mubr.bf16.gmra.mxu0 %v284
      %v337 = vpop.f32.mrf.mxu0
      %v338 = vadd.f32 %v237, %v337
      %v339 = vpop.f32.mrf.mxu0
      %v340 = vadd.f32 %v237, %v339
      %v341 = vpop.f32.mrf.mxu0
      %v342 = vadd.f32 %v242, %v341
      %v343 = vpop.f32.mrf.mxu0
      %v344 = vadd.f32 %v242, %v343
      %345 = vdwg.mxu0
      %v346 = vlaneseq
      %v347 = vshrl.u32 %v346, 7
      %v348 = vadd.s32 %v347, 8
      %v349 = vadd.s32 %v347, 16
      %v350 = vadd.s32 %v347, 24
      %vm351 = vcmp.ge.s32.totalorder %v347, 18
      %vm352 = vcmp.ge.s32.totalorder %v348, 18
      %vm353 = vcmp.ge.s32.totalorder %v349, 18
      %vm354 = vcmp.ge.s32.totalorder %v350, 18
      %v355 = vxor.u32 %v328, 2147483648
      %v356 = vxor.u32 %v330, 2147483648
      %v357 = vxor.u32 %v332, 2147483648
      %v358 = vxor.u32 %v334, 2147483648
      %v359 = vxor.u32 %v338, 2147483648
      %v360 = vxor.u32 %v340, 2147483648
      %v361 = vxor.u32 %v342, 2147483648
      %v362 = vxor.u32 %v344, 2147483648
      %v363 = vmul.f32 %v355, 1.442695
      %v364 = vpow.pop %v363
      %v365 = vmul.f32 %v356, 1.442695
      %v366 = vpow.pop %v365
      %v367 = vmul.f32 %v357, 1.442695
      %v368 = vpow.pop %v367
      %v369 = vmul.f32 %v358, 1.442695
      %v370 = vpow.pop %v369
      %v371 = vmul.f32 %v359, 1.442695
      %v372 = vpow.pop %v371
      %v373 = vmul.f32 %v360, 1.442695
      %v374 = vpow.pop %v373
      %v375 = vmul.f32 %v361, 1.442695
      %v376 = vpow.pop %v375
      %v377 = vmul.f32 %v362, 1.442695
      %v378 = vpow.pop %v377
      %v379 = vadd.f32 %v364, 1.0
      %v380 = vadd.f32 %v366, 1.0
      %v381 = vadd.f32 %v368, 1.0
      %v382 = vadd.f32 %v370, 1.0
      %v383 = vadd.f32 %v372, 1.0
      %v384 = vadd.f32 %v374, 1.0
      %v385 = vadd.f32 %v376, 1.0
      %v386 = vadd.f32 %v378, 1.0
      %v387 = vrcp.pop %v379
      %v388 = vmul.f32 1.0, %v387
      %v389 = vrcp.pop %v380
      %v390 = vmul.f32 1.0, %v389
      %v391 = vrcp.pop %v381
      %v392 = vmul.f32 1.0, %v391
      %v393 = vrcp.pop %v382
      %v394 = vmul.f32 1.0, %v393
      %v395 = vrcp.pop %v383
      %v396 = vmul.f32 1.0, %v395
      %v397 = vrcp.pop %v384
      %v398 = vmul.f32 1.0, %v397
      %v399 = vrcp.pop %v385
      %v400 = vmul.f32 1.0, %v399
      %v401 = vrcp.pop %v386
      %v402 = vmul.f32 1.0, %v401
      %v403 = vmul.f32 %v388, 2.0
      %v404 = vmul.f32 %v390, 2.0
      %v405 = vmul.f32 %v392, 2.0
      %v406 = vmul.f32 %v394, 2.0
      %v407 = vmul.f32 %v396, 2.0
      %v408 = vmul.f32 %v398, 2.0
      %v409 = vmul.f32 %v400, 2.0
      %v410 = vmul.f32 %v402, 2.0
      %v411 = vsel %vm351, %v403, %v328
      %v412 = vsel %vm351, %v404, %v330
      %v413 = vsel %vm352, %v405, %v332
      %v414 = vsel %vm352, %v406, %v334
      %v415 = vsel %vm353, %v407, %v338
      %v416 = vsel %vm353, %v408, %v340
      %v417 = vsel %vm354, %v409, %v342
      %v418 = vsel %vm354, %v410, %v344
      %419 = vst [vmem:[%s208] sm:$0xff] %v411
      %420 = vst [vmem:[%s208 + $0x8] sm:$0xff] %v412
      %421 = vst [vmem:[%s208 + $0x10] sm:$0xff] %v413
      %422 = vst [vmem:[%s208 + $0x18] sm:$0xff] %v414
      %423 = vst [vmem:[%s208 + $0x20] sm:$0xff] %v415
      %424 = vst [vmem:[%s208 + $0x28] sm:$0xff] %v416
      %425 = vst [vmem:[%s208 + $0x30] sm:$0x7] %v417
      %426 = vst [vmem:[%s208 + $0x38] sm:$0x7] %v418
      %s427 = smul.u32 2, %s19
      %p428 = scmp.lt.s32.totalorder %s18, 1
      %s429 = scalar_select %p428, %s18, 1
      %p430 = scmp.lt.s32.totalorder %s427, 1
      %s431 = scalar_select %p430, %s427, 1
      %s432 = smul.addr %s429, 8
      %s433 = sadd.s32 %s431, %s432
      %s434 = smul.addr %s433, 8
      %s435 = scalar_lea.vmem %s3, %s434
      // Predicated region
      $region33: #{deformable_conv2d_forward.2} parent=31 // pred_check
        %p436 = pneg %p116
      $region34: #{deformable_conv2d_forward.2} parent=31 // pred_check_branch
        %438 = sbr.rel (%p436) target = $region36
      $region35: #{deformable_conv2d_forward.2} parent=31 // pred_region
        %s439 = smul.u32 2, %s19
      $region36: #{deformable_conv2d_forward.2} parent=31 // pred_fallthru
        _
    $region32: #{deformable_conv2d_forward.2} parent=5 // pred_fallthru
      _
    %p440 = scmp.le.s32.totalorder 2, %s9
    // Predicated region
    $region37: #{deformable_conv2d_forward.2} parent=5 // pred_check
      %p441 = pneg %p440
    $region38: #{deformable_conv2d_forward.2} parent=5 // pred_check_branch
      %443 = sbr.rel (%p441) target = $region40
    $region39: #{deformable_conv2d_forward.2} parent=5 // pred_region
      %s444 = ssub.s32 %s9, 2
      // Predicated region
      $region41: #{deformable_conv2d_forward.2} parent=39 // pred_check
        %p445 = pneg %p122
      $region42: #{deformable_conv2d_forward.2} parent=39 // pred_check_branch
        %447 = sbr.rel (%p445) target = $region44
      $region43: #{deformable_conv2d_forward.2} parent=39 // pred_region
        %s448 = smul.u32 2, %s21
        %p449 = scmp.lt.s32.totalorder %s20, 1
        %s450 = scalar_select %p449, %s20, 1
        %p451 = scmp.lt.s32.totalorder %s448, 1
        %s452 = scalar_select %p451, %s448, 1
        %s453 = smul.addr %s450, 8
        %s454 = sadd.s32 %s452, %s453
        %s455 = smul.addr %s454, 8
        %s456 = scalar_lea.vmem %s3, %s455
      $region44: #{deformable_conv2d_forward.2} parent=39 // pred_fallthru
        _
    $region40: #{deformable_conv2d_forward.2} parent=5 // pred_fallthru
      _
  $region6: #{deformable_conv2d_forward.2} parent=0 // loop_footer
    %s13 = sadd.s32 1, %s9
  $region7: #{deformable_conv2d_forward.2} parent=0 // loop_footer_branch
    %8 = sbr.rel target = $region3
  $region8: #{deformable_conv2d_forward.2} parent=0 // loop_exit
    _

// kernel: deformable_conv2d_forward.3
$region0: #{deformable_conv2d_forward.3}
  #allocation0 [shape = 'u32[]', space=smem, size = 0x4, offset = 0x4, fixed_abs, tag = 'smem constant byte address 0x4 - core index']
  #allocation1 [shape = 'u32[144,128]{1,0:T(1,128)}', space=vmem, size = 0x12000, scoped, tag = 'internal scratch']
  %s0 = inlined_call_operand.vmem [shape: bf16[8,36], index: 0, kind: input, shape index: {}]
  %s1 = inlined_call_operand.vmem [shape: bf16[2,36,256], index: 1, kind: input, shape index: {}]
  %s2 = inlined_call_operand.vmem [shape: f32[2,8,256], index: 2, kind: output, shape index: {}]
  %s3 = sld [smem:[#allocation0]]
  $region41: #{deformable_conv2d_forward.3} parent=0
    _
  %s5 = ssub.s32 1, %s3
  %s6 = scalar_select 0, %s5, %s3
  loop: start=0, step=1, limit=4
  $region2: #{deformable_conv2d_forward.3} parent=0 // loop_pre_header
    _
  $region3: #{deformable_conv2d_forward.3} parent=0 // loop_header
    %s8 = sphi 0, %s12
    %p9 = scmp.ge.s32.totalorder %s8, 4
    %s15 = sphi 0, %s27
    %s16 = sphi 0, %s23
    %s17 = sphi 0, %s15
    %s18 = sphi 0, %s16
    %s19 = sphi 0, %s17
    %s20 = sphi 0, %s18
    %s28 = sphi 0, %s28
    %s30 = sphi 0, %s28
    %s31 = sphi 0, %s30
    %s45 = sphi 0, %s31
    %s53 = sphi 0, %s55
    %s56 = sphi 0, %s53
    %s57 = sphi 0, %s56
    %s73 = sphi 0, %s57
    %s81 = sphi 0, %s83
    %s84 = sphi 0, %s81
    %s85 = sphi 0, %s84
    %s101 = sphi 0, %s85
  $region4: #{deformable_conv2d_forward.3} parent=0 // loop_header_branch
    %11 = sbr.rel (%p9) target = $region8
  $region5: #{deformable_conv2d_forward.3} parent=0 // loop_body
    %s13 = ssub.s32 %s8, 1
    %s14 = ssub.s32 %s8, 2
    %s21 = sadd.s32 1, %s16
    %p22 = scmp.ge.s32.totalorder %s21, 1
    %s23 = scalar_select %p22, 0, %s21
    %s24 = sadd.s32 1, %s15
    %s25 = scalar_select %p22, %s24, %s15
    %p26 = scmp.ge.s32.totalorder %s25, 2
    %s27 = scalar_select %p26, 0, %s25
    %s29 = sadd.s32 %s28, 1
    %p32 = scmp.eq.s32.totalorder %s8, 1
    %p33 = scmp.ne.s32.totalorder %s28, %s30
    %p34 = scmp.eq.s32.totalorder %s8, 0
    %p35 = por %p33, %p34
    %p36 = scmp.ne.s32.totalorder %s28, %s30
    %p37 = scmp.eq.s32.totalorder %s13, 1
    %p38 = por %p36, %p37
    %p39 = scmp.ne.s32.totalorder %s30, %s31
    %p40 = scmp.eq.s32.totalorder %s13, 0
    %p41 = por %p39, %p40
    %p42 = scmp.ne.s32.totalorder %s30, %s31
    %p43 = scmp.eq.s32.totalorder %s14, 1
    %p44 = por %p42, %p43
    %p46 = scmp.ne.s32.totalorder %s31, %s45
    %p47 = scmp.eq.s32.totalorder %s14, 0
    %p48 = por %p46, %p47
    %s49 = ssub.s32 %s15, %s27
    %s50 = ssub.s32 %s16, %s23
    %s51 = sor.u32 %s49, %s50
    %p52 = scmp.eq.s32.totalorder %s51, 0
    %s54 = sadd.s32 %s53, 1
    %s55 = scalar_select %p52, %s53, %s54
    %p58 = pneg %p52
    %p59 = scmp.eq.s32.totalorder %s8, 1
    %p60 = por %p58, %p59
    %p61 = scmp.ne.s32.totalorder %s53, %s56
    %p62 = scmp.eq.s32.totalorder %s8, 0
    %p63 = por %p61, %p62
    %p64 = scmp.ne.s32.totalorder %s53, %s56
    %p65 = scmp.eq.s32.totalorder %s13, 1
    %p66 = por %p64, %p65
    %p67 = scmp.ne.s32.totalorder %s56, %s57
    %p68 = scmp.eq.s32.totalorder %s13, 0
    %p69 = por %p67, %p68
    %p70 = scmp.ne.s32.totalorder %s56, %s57
    %p71 = scmp.eq.s32.totalorder %s14, 1
    %p72 = por %p70, %p71
    %p74 = scmp.ne.s32.totalorder %s57, %s73
    %p75 = scmp.eq.s32.totalorder %s14, 0
    %p76 = por %p74, %p75
    %s77 = ssub.s32 %s15, %s27
    %s78 = ssub.s32 %s16, %s23
    %s79 = sor.u32 %s77, %s78
    %p80 = scmp.eq.s32.totalorder %s79, 0
    %s82 = sadd.s32 %s81, 1
    %s83 = scalar_select %p80, %s81, %s82
    %p86 = pneg %p80
    %p87 = scmp.eq.s32.totalorder %s8, 1
    %p88 = por %p86, %p87
    %p89 = scmp.ne.s32.totalorder %s81, %s84
    %p90 = scmp.eq.s32.totalorder %s8, 0
    %p91 = por %p89, %p90
    %p92 = scmp.ne.s32.totalorder %s81, %s84
    %p93 = scmp.eq.s32.totalorder %s13, 1
    %p94 = por %p92, %p93
    %p95 = scmp.ne.s32.totalorder %s84, %s85
    %p96 = scmp.eq.s32.totalorder %s13, 0
    %p97 = por %p95, %p96
    %p98 = scmp.ne.s32.totalorder %s84, %s85
    %p99 = scmp.eq.s32.totalorder %s14, 1
    %p100 = por %p98, %p99
    %p102 = scmp.ne.s32.totalorder %s85, %s101
    %p103 = scmp.eq.s32.totalorder %s14, 0
    %p104 = por %p102, %p103
    %p105 = scmp.le.s32.totalorder 1, %s8
    %p106 = scmp.lt.s32.totalorder %s8, 3
    %p107 = pnand %p105, %p106
    %p108 = pneg %p107
    // Predicated region
    $region9: #{deformable_conv2d_forward.3} parent=5 // pred_check
      _
    $region10: #{deformable_conv2d_forward.3} parent=5 // pred_check_branch
      %110 = sbr.rel (%p107) target = $region12
    $region11: #{deformable_conv2d_forward.3} parent=5 // pred_region
      %s111 = ssub.s32 %s8, 1
      // Predicated region
      $region13: #{deformable_conv2d_forward.3} parent=11 // pred_check
        %p112 = pneg %p41
      $region14: #{deformable_conv2d_forward.3} parent=11 // pred_check_branch
        %114 = sbr.rel (%p112) target = $region16
      $region15: #{deformable_conv2d_forward.3} parent=11 // pred_region
        _
      $region16: #{deformable_conv2d_forward.3} parent=11 // pred_fallthru
        _
    $region12: #{deformable_conv2d_forward.3} parent=5 // pred_fallthru
      _
    %p115 = scmp.lt.s32.totalorder %s8, 2
    // Predicated region
    $region17: #{deformable_conv2d_forward.3} parent=5 // pred_check
      %p116 = pneg %p115
    $region18: #{deformable_conv2d_forward.3} parent=5 // pred_check_branch
      %118 = sbr.rel (%p116) target = $region20
    $region19: #{deformable_conv2d_forward.3} parent=5 // pred_region
      // Predicated region
      $region21: #{deformable_conv2d_forward.3} parent=19 // pred_check
        %p119 = pneg %p63
      $region22: #{deformable_conv2d_forward.3} parent=19 // pred_check_branch
        %121 = sbr.rel (%p119) target = $region24
      $region23: #{deformable_conv2d_forward.3} parent=19 // pred_region
        %s122 = smul.u32 2, %s16
        %p123 = scmp.lt.s32.totalorder %s15, 1
        %s124 = scalar_select %p123, %s15, 1
        %p125 = scmp.lt.s32.totalorder %s122, 1
        %s126 = scalar_select %p125, %s122, 1
        %s127 = smul.addr %s124, 10
        %s128 = sadd.s32 %s126, %s127
        %s129 = smul.addr %s128, 4
        %s130 = scalar_lea.vmem %s1, %s129
        %s131 = smul.u32 2, %s16
      $region24: #{deformable_conv2d_forward.3} parent=19 // pred_fallthru
        _
    $region20: #{deformable_conv2d_forward.3} parent=5 // pred_fallthru
      _
    %p132 = scmp.le.s32.totalorder 1, %s8
    %p133 = scmp.lt.s32.totalorder %s8, 3
    %p134 = pnand %p132, %p133
    %p135 = pneg %p134
    // Predicated region
    $region25: #{deformable_conv2d_forward.3} parent=5 // pred_check
      _
    $region26: #{deformable_conv2d_forward.3} parent=5 // pred_check_branch
      %137 = sbr.rel (%p134) target = $region28
    $region27: #{deformable_conv2d_forward.3} parent=5 // pred_region
      %s138 = ssub.s32 %s8, 1
      %p139 = pneg %p41
      %p140 = pneg %p38
      %s141 = smul.u32 2, %s18
      %p142 = scmp.lt.s32.totalorder %s17, 1
      %s143 = scalar_select %p142, %s17, 1
      %p144 = scmp.lt.s32.totalorder %s141, 1
      %s145 = scalar_select %p144, %s141, 1
      %s146 = smul.addr %s143, 10
      %s147 = sadd.s32 %s145, %s146
      %s148 = smul.addr %s147, 4
      %s149 = scalar_lea.vmem %s1, %s148
      %p150 = pneg %p69
      %p151 = pneg %p66
      %p152 = pneg %p97
      %p153 = pneg %p94
      %s154 = smul.u32 2, %s18
      %p155 = scmp.lt.s32.totalorder %s17, 1
      %s156 = scalar_select %p155, %s17, 1
      %p157 = scmp.lt.s32.totalorder %s154, 1
      %s158 = scalar_select %p157, %s154, 1
      %s159 = smul.addr %s156, 2
      %s160 = sadd.s32 %s158, %s159
      %s161 = smul.addr %s160, 8
      %s162 = scalar_lea.vmem %s2, %s161
      %s163 = smul.u32 2, %s18
      %p164 = scmp.lt.s32.totalorder %s17, 1
      %s165 = scalar_select %p164, %s17, 1
      %p166 = scmp.lt.s32.totalorder %s163, 1
      %s167 = scalar_select %p166, %s163, 1
      %s168 = smul.addr %s165, 10
      %s169 = sadd.s32 %s167, %s168
      %s170 = smul.addr %s169, 4
      %s171 = scalar_lea.vmem %s1, %s170
      %s172 = smul.u32 2, %s18
      %s173 = smul.u32 2, %s18
      %p174 = scmp.lt.s32.totalorder %s17, 1
      %s175 = scalar_select %p174, %s17, 1
      %p176 = scmp.lt.s32.totalorder %s173, 1
      %s177 = scalar_select %p176, %s173, 1
      %s178 = smul.addr %s175, 2
      %s179 = sadd.s32 %s177, %s178
      %s180 = smul.addr %s179, 8
      %s181 = scalar_lea.vmem %s2, %s180
      %s182 = smul.u32 2, %s18
      %v184 = vld [vmem:[%s0] sm:$0xf]
      %v185 = vld [vmem:[%s171] sm:$0xff]
      %v186 = vld [vmem:[%s171 + $0x8] sm:$0xff]
      %v187 = vld [vmem:[%s171 + $0x10] sm:$0xff]
      %v188 = vld [vmem:[%s171 + $0x18] sm:$0xff]
      %v189 = vld [vmem:[%s171 + $0x20] sm:$0x33]
      %v195 = vunpack.c.l.b16 %v185
      %v196 = vunpack.c.h.b16 %v185
      %v197 = vunpack.c.l.b16 %v186
      %v198 = vunpack.c.h.b16 %v186
      %v199 = vunpack.c.l.b16 %v187
      %v200 = vunpack.c.h.b16 %v187
      %v201 = vunpack.c.l.b16 %v188
      %v202 = vunpack.c.h.b16 %v188
      %v203 = vunpack.c.l.b16 %v189
      %v204 = vunpack.c.h.b16 %v189
      %v205 = vpack.c.b16 %v197, %v195
      %v206 = vpack.c.b16 %v198, %v196
      %v207 = vpack.c.b16 %v201, %v199
      %v208 = vpack.c.b16 %v202, %v200
      %v209 = vpack.c.b16 %v203, %v203
      %v210 = vpack.c.b16 %v204, %v204
      %vm215 = vcmask 293888
      %v217 = vsel %vm215, %v184, 0
      %vm219 = vcmask 1041408
      %v221 = vsel %vm219, %v209, 0
      %v224 = vsel %vm219, %v210, 0
      %226 = vmatprep.subr.bf16.mxu0 0
      %227 = vmatpush1.bf16.msra.mxu0 0
      %228 = vmatprep.subr.bf16.mxu0 0
      %229 = vmatpush1.bf16.msra.mxu0 0
      %230 = vmatprep.subr.bf16.mxu0 0
      %231 = vmatpush1.bf16.msra.mxu0 0
      %232 = vmatprep.subr.bf16.mxu0 0
      %233 = vmatpush1.bf16.msra.mxu0 0
      %234 = vmatprep.subr.bf16.mxu0 0
      %235 = vmatpush1.bf16.msra.mxu0 0
      %236 = vmatprep.subr.bf16.mxu0 %v224
      %237 = vmatpush1.bf16.msra.mxu0 %v221
      %238 = vmatprep.subr.bf16.mxu0 %v208
      %239 = vmatpush1.bf16.msra.mxu0 %v207
      %240 = vmatprep.subr.bf16.mxu0 %v206
      %241 = vmatpush1.bf16.msra.mxu0 %v205
      %242 = vmatprep.subr.bf16.mxu0 0
      %243 = vmatpush2.bf16.msra.mxu0 0
      %244 = vmatprep.subr.bf16.mxu0 0
      %245 = vmatpush2.bf16.msra.mxu0 0
      %246 = vmatprep.subr.bf16.mxu0 0
      %247 = vmatpush2.bf16.msra.mxu0 0
      %248 = vmatprep.subr.bf16.mxu0 0
      %249 = vmatpush2.bf16.msra.mxu0 0
      %250 = vmatprep.subr.bf16.mxu0 0
      %251 = vmatpush2.bf16.msra.mxu0 0
      %252 = vmatprep.subr.bf16.mxu0 0
      %253 = vmatpush2.bf16.msra.mxu0 0
      %254 = vmatprep.subr.bf16.mxu0 0
      %255 = vmatpush2.bf16.msra.mxu0 0
      %256 = vmatprep.subr.bf16.mxu0 0
      %257 = vmatpush2.bf16.msra.mxu0 0
      %258 = vmatprep.mubr.bf16.mxu0 0
      %259 = vmatmul.mubr.bf16.gmra.mxu0 %v217
      %v260 = vpop.f32.mrf.mxu0
      %v261 = vadd.f32 0.0, %v260
      %v262 = vpop.f32.mrf.mxu0
      %v263 = vadd.f32 0.0, %v262
      %v264 = vpop.f32.mrf.mxu0
      %v265 = vpop.f32.mrf.mxu0
      %266 = vdwg.mxu0
      %267 = vst [vmem:[%s181] sm:$0xff] %v261
      %268 = vst [vmem:[%s181 + $0x8] sm:$0xff] %v263
      %s269 = smul.u32 2, %s18
      %p270 = scmp.lt.s32.totalorder %s17, 1
      %s271 = scalar_select %p270, %s17, 1
      %p272 = scmp.lt.s32.totalorder %s269, 1
      %s273 = scalar_select %p272, %s269, 1
      %s274 = smul.addr %s271, 2
      %s275 = sadd.s32 %s273, %s274
      %s276 = smul.addr %s275, 8
      %s277 = scalar_lea.vmem %s2, %s276
      // Predicated region
      $region29: #{deformable_conv2d_forward.3} parent=27 // pred_check
        %p278 = pneg %p94
      $region30: #{deformable_conv2d_forward.3} parent=27 // pred_check_branch
        %280 = sbr.rel (%p278) target = $region32
      $region31: #{deformable_conv2d_forward.3} parent=27 // pred_region
        %s281 = smul.u32 2, %s18
      $region32: #{deformable_conv2d_forward.3} parent=27 // pred_fallthru
        _
    $region28: #{deformable_conv2d_forward.3} parent=5 // pred_fallthru
      _
    %p282 = scmp.le.s32.totalorder 2, %s8
    // Predicated region
    $region33: #{deformable_conv2d_forward.3} parent=5 // pred_check
      %p283 = pneg %p282
    $region34: #{deformable_conv2d_forward.3} parent=5 // pred_check_branch
      %285 = sbr.rel (%p283) target = $region36
    $region35: #{deformable_conv2d_forward.3} parent=5 // pred_region
      %s286 = ssub.s32 %s8, 2
      // Predicated region
      $region37: #{deformable_conv2d_forward.3} parent=35 // pred_check
        %p287 = pneg %p100
      $region38: #{deformable_conv2d_forward.3} parent=35 // pred_check_branch
        %289 = sbr.rel (%p287) target = $region40
      $region39: #{deformable_conv2d_forward.3} parent=35 // pred_region
        %s290 = smul.u32 2, %s20
        %p291 = scmp.lt.s32.totalorder %s19, 1
        %s292 = scalar_select %p291, %s19, 1
        %p293 = scmp.lt.s32.totalorder %s290, 1
        %s294 = scalar_select %p293, %s290, 1
        %s295 = smul.addr %s292, 2
        %s296 = sadd.s32 %s294, %s295
        %s297 = smul.addr %s296, 8
        %s298 = scalar_lea.vmem %s2, %s297
      $region40: #{deformable_conv2d_forward.3} parent=35 // pred_fallthru
        _
    $region36: #{deformable_conv2d_forward.3} parent=5 // pred_fallthru
      _
  $region6: #{deformable_conv2d_forward.3} parent=0 // loop_footer
    %s12 = sadd.s32 1, %s8
  $region7: #{deformable_conv2d_forward.3} parent=0 // loop_footer_branch
    %7 = sbr.rel target = $region3
  $region8: #{deformable_conv2d_forward.3} parent=0 // loop_exit
    _

</llo_original>
